<compile_context>
chip_gen: v7x
topology: tpu7x:2x2x1
jax: 0.10.0
libtpu: 0.0.40
codegen_flags: <defaults>
</compile_context>

<pallas_src>
import functools

import jax
import jax.numpy as jnp
from jax import lax
from jax.experimental import pallas as pl
from jax.experimental.pallas import tpu as pltpu

IGNORE_INDEX = -1  # matches MultiTaskLoss(ignore_index=-1)

LOGICAL_FORM = "logical_form"
NER = "ner"
COREF = "coref"
GRAPH = "graph"
MULTITASK = "multitask"
TASKS = (LOGICAL_FORM, NER, COREF, GRAPH)

_LANE = 128                              # lane width / sample-tile granularity
_LOGITS_BLOCK_BYTES = 4 * 1024 * 1024    # ~4 MiB streamed logits block
_MAX_TILE_N = 32 * 1024                  # bounds (1, tile_n) scratch/intermediates
_VMEM_LIMIT_BYTES = 32 * 1024 * 1024     # safe on v5e/v6e (128 MiB) and v7x (64 MiB)


# ---------------------------------------------------------------------------
# Cross-entropy (ignore_index, 'mean') — lane-dense streaming reduction.
# Logits arrive transposed as (C, N); the grid walks lane tiles of N.
# ---------------------------------------------------------------------------
def _ce_sum_kernel(logits_ref, target_ref, loss_ref, acc_total, acc_count,
                   *, n_rows, ignore_index):
    i = pl.program_id(0)

    @pl.when(i == 0)
    def _init():
        acc_total[...] = jnp.zeros_like(acc_total)
        acc_count[...] = jnp.zeros_like(acc_count)

    logits = logits_ref[...].astype(jnp.float32)        # (C, tile_n) f32
    tgt = target_ref[...]                                # (1, tile_n) int32
    c, tn = logits.shape

    # Columns past n_rows are cdiv padding (garbage data); columns whose target
    # is ignore_index are excluded from the mean.
    col = lax.broadcasted_iota(jnp.int32, (1, tn), 1) + i * tn
    valid = jnp.logical_and(col < n_rows, tgt != ignore_index)   # (1, tile_n)

    # Numerically stable log-sum-exp over the class (sublane) axis with the
    # target gather fused into the already-shifted logits.  All per-sample
    # quantities are lane-dense (1, tile_n) vectors.
    m = jnp.max(logits, axis=0, keepdims=True)                    # (1, tile_n)
    shifted = logits - m                                          # (C, tile_n)
    cls = lax.broadcasted_iota(jnp.int32, (c, tn), 0)
    tgt_shifted = jnp.sum(jnp.where(cls == tgt, shifted, 0.0),
                          axis=0, keepdims=True)                  # (1, tile_n)
    lse_shifted = jnp.log(jnp.sum(jnp.exp(shifted), axis=0, keepdims=True))
    per_sample = lse_shifted - tgt_shifted        # == lse - target_logit

    # where (not multiply) so NaN/Inf in masked columns cannot poison the sums.
    # Pure vector adds per step — no per-step scalar reduction chain.
    acc_total[...] += jnp.where(valid, per_sample, 0.0)
    acc_count[...] += valid.astype(jnp.float32)

    @pl.when(i == pl.num_programs(0) - 1)
    def _finalize():
        total = jnp.sum(acc_total[...], axis=1, keepdims=True)    # (1, 1)
        count = jnp.sum(acc_count[...], axis=1, keepdims=True)    # (1, 1)
        # 'mean' over non-ignored samples; 0/0 -> NaN if every sample is
        # ignored (matches current PyTorch behaviour).
        loss_ref[...] = total / count


def _pick_tile_n(n, c, itemsize, block_bytes=_LOGITS_BLOCK_BYTES):
    """Byte-sized sample tile: target ~block_bytes of logits per grid step,
    capped at 32768 samples; multiples of 128 (lane width) unless the whole
    array fits in one block (then the full dim is always legal)."""
    budget = max(1, block_bytes // max(1, c * itemsize))
    budget = min(budget, _MAX_TILE_N)
    if n <= budget:
        return int(n)                      # single full block
    t = max(_LANE, (budget // _LANE) * _LANE)
    return int(min(t, n))


def single_task_loss(output, target, *, ignore_index=IGNORE_INDEX, tile_n=None,
                     logits_block_bytes=_LOGITS_BLOCK_BYTES):
    """output: (N, C) float logits, target: (N,) int labels -> scalar f32 loss."""
    n, c = output.shape
    itemsize = jnp.dtype(output.dtype).itemsize
    if tile_n is None:
        tile_n = _pick_tile_n(n, c, itemsize, logits_block_bytes)
    else:
        tile_n = int(tile_n)
        tile_n = n if tile_n >= n else max(_LANE, (tile_n // _LANE) * _LANE)
    num_tiles = (n + tile_n - 1) // tile_n

    # Lane-dense layout pass (samples on the lane axis).  Dtype stays native in
    # HBM/VMEM; upcast to f32 happens in-register inside the kernel.
    logits_t = output.T                                 # (C, N)
    target2d = target.astype(jnp.int32).reshape(1, n)   # (1, N)

    block_bytes = tile_n * c * itemsize
    vmem_limit = max(_VMEM_LIMIT_BYTES, 3 * block_bytes + (1 << 20))

    kernel = functools.partial(_ce_sum_kernel, n_rows=n,
                               ignore_index=ignore_index)
    cost = pl.CostEstimate(
        flops=6 * n * c,
        transcendentals=n * (c + 1),
        bytes_accessed=n * c * itemsize + n * 4 + 4,
    )
    loss = pl.pallas_call(
        kernel,
        out_shape=jax.ShapeDtypeStruct((1, 1), jnp.float32),
        grid=(num_tiles,),
        in_specs=[
            pl.BlockSpec((c, tile_n), lambda i: (0, i)),   # logits lane tile
            pl.BlockSpec((1, tile_n), lambda i: (0, i)),   # target lane tile
        ],
        out_specs=pl.BlockSpec((1, 1), lambda i: (0, 0)),  # resident accumulator
        scratch_shapes=[
            pltpu.VMEM((1, tile_n), jnp.float32),   # per-lane partial loss sums
            pltpu.VMEM((1, tile_n), jnp.float32),   # per-lane partial valid counts
        ],
        compiler_params=pltpu.CompilerParams(
            dimension_semantics=("arbitrary",),            # reduction axis
            vmem_limit_bytes=vmem_limit),
        cost_estimate=cost,
    )(logits_t, target2d)
    return loss[0, 0]


# ---------------------------------------------------------------------------
# Multi-task uncertainty weighting (plain jnp — 12 floats, XLA fuses it).
# ---------------------------------------------------------------------------
class MultiTaskLoss:
    """JAX/Pallas equivalent of the PyTorch MultiTaskLoss forward."""

    def __init__(self, ignore_index=IGNORE_INDEX):
        self.ignore_index = ignore_index
        self.mml_emp = jnp.ones((4,), jnp.float32)     # [True, True, True, True]
        self.log_vars = jnp.zeros((4,), jnp.float32)   # nn.Parameter init (zeros)

    def __call__(self, output, target):
        task_losses = jnp.stack([
            single_task_loss(output[k], target[k], ignore_index=self.ignore_index)
            for k in TASKS
        ]).astype(jnp.float32)                          # (4,)

        log_vars = self.log_vars.astype(jnp.float32)
        # stds = exp(log_vars)**0.5; weights = 1/((mml_emp+1)*stds**2);
        # losses = weights*task_losses + log(stds) = .../(2*exp(lv)) + lv/2.
        weights = 1.0 / ((self.mml_emp + 1.0) * jnp.exp(log_vars))
        losses = weights * task_losses + 0.5 * log_vars

        # TODO(synk): the PyTorch module indexes this dict with the global
        # `args.task`; that is host-side config, so the full dict is returned.
        return {LOGICAL_FORM: losses[0], NER: losses[1], COREF: losses[2],
                GRAPH: losses[3], MULTITASK: jnp.mean(losses)}


# ---------------------------------------------------------------------------
# Pure-JAX references for verification.
# ---------------------------------------------------------------------------
def _ce_ref(output, target, ignore_index=IGNORE_INDEX):
    logits = output.astype(jnp.float32)
    lse = jax.nn.logsumexp(logits, axis=-1)
    tgt_c = jnp.clip(target, 0, logits.shape[-1] - 1)
    tgt_logit = jnp.take_along_axis(logits, tgt_c[:, None], axis=-1)[:, 0]
    per = lse - tgt_logit
    valid = target != ignore_index
    return jnp.sum(jnp.where(valid, per, 0.0)) / jnp.sum(valid.astype(jnp.float32))


def _multitask_ref(output, target, log_vars):
    tl = jnp.stack([_ce_ref(output[k], target[k]) for k in TASKS])
    stds = jnp.sqrt(jnp.exp(log_vars))
    weights = 1.0 / (2.0 * stds ** 2)        # mml_emp all True -> (1 + 1)
    losses = weights * tl + jnp.log(stds)
    return losses, jnp.mean(losses)


if __name__ == "__main__":
    key = jax.random.PRNGKey(0)
    keys = jax.random.split(key, 10)

    # Small per-task shapes: (N, C) logits + (N,) int targets per task.
    task_shapes = {LOGICAL_FORM: (16, 32), NER: (20, 24),
                   COREF: (16, 8), GRAPH: (16, 40)}
    output, target = {}, {}
    for idx, (k, (n, c)) in enumerate(task_shapes.items()):
        output[k] = jax.random.normal(keys[2 * idx], (n, c), dtype=jnp.float32)
        t = jax.random.randint(keys[2 * idx + 1], (n,), 0, c, dtype=jnp.int32)
        t = t.at[0].set(IGNORE_INDEX).at[n // 2].set(IGNORE_INDEX)  # ignored rows
        target[k] = t

    mtl = MultiTaskLoss(ignore_index=IGNORE_INDEX)
    log_vars = jnp.array([0.1, -0.2, 0.3, 0.05], dtype=jnp.float32)
    mtl.log_vars = log_vars                  # non-trivial weighting for the test

    result = mtl(output, target)
    jax.block_until_ready(result[MULTITASK])

    ref_losses, ref_mean = _multitask_ref(output, target, log_vars)
    for i, k in enumerate(TASKS):
        assert jnp.allclose(result[k], ref_losses[i], rtol=1e-5, atol=1e-5), \
            (k, result[k], ref_losses[i])
    assert jnp.allclose(result[MULTITASK], ref_mean, rtol=1e-5, atol=1e-5), \
        (result[MULTITASK], ref_mean)

    # Extra check: multi-tile streaming + ragged-tail masking (300 samples,
    # 128-wide lane tiles -> 3 grid steps, last tile has 44 valid columns).
    x = jax.random.normal(keys[8], (300, 32), dtype=jnp.float32)
    tk = jax.random.randint(keys[9], (300,), 0, 32, dtype=jnp.int32)
    tk = tk.at[5].set(IGNORE_INDEX).at[270].set(IGNORE_INDEX)
    got = jax.block_until_ready(single_task_loss(x, tk, tile_n=128))
    ref = _ce_ref(x, tk)
    assert jnp.allclose(got, ref, rtol=1e-5, atol=1e-5), (got, ref)

    print("KERNEL_OK")
</pallas_src>

<mosaic_0001>
module attributes {stable_mosaic.version = 11 : i64} {
  func.func @_ce_sum_kernel(%arg0: i32, %arg1: memref<32x16xf32, #tpu.memory_space<vmem>>, %arg2: memref<1x16xi32, #tpu.memory_space<vmem>>, %arg3: memref<1x1xf32, #tpu.memory_space<vmem>>, %arg4: memref<1x16xf32, #tpu.memory_space<vmem>>, %arg5: memref<1x16xf32, #tpu.memory_space<vmem>>) attributes {dimension_semantics = [#tpu.dimension_semantics<arbitrary>], iteration_bounds = array<i64: 1>, scalar_prefetch = 0 : i64, scratch_operands = 2 : i64, tpu.core_type = #tpu.core_type<tc>, window_params = [{transform_indices = @transform_0, window_bounds = array<i64: 32, 16>}, {transform_indices = @transform_1, window_bounds = array<i64: 1, 16>}, {pipeline_mode = #tpu.pipeline_mode<synchronous>, transform_indices = @transform_2, window_bounds = array<i64: 1, 1>}]} {
    %c0_i32 = arith.constant 0 : i32
    %0 = arith.cmpi eq, %arg0, %c0_i32 : i32
    %1 = arith.extui %0 : i1 to i32
    %c0_i32_0 = arith.constant 0 : i32
    %2 = arith.cmpi ne, %1, %c0_i32_0 : i32
    scf.if %2 {
      %cst_19 = arith.constant 0.000000e+00 : f32
      %43 = vector.broadcast %cst_19 : f32 to vector<1x16xf32>
      %c0_20 = arith.constant 0 : index
      %c0_21 = arith.constant 0 : index
      %44 = vector.load %arg4[%c0_20, %c0_21] : memref<1x16xf32, #tpu.memory_space<vmem>>, vector<1x16xf32>
      tpu.vector_store %arg4[%c0_20, %c0_21], %43 {strides = array<i32>} : memref<1x16xf32, #tpu.memory_space<vmem>>, vector<1x16xf32>,
      %cst_22 = arith.constant 0.000000e+00 : f32
      %45 = vector.broadcast %cst_22 : f32 to vector<1x16xf32>
      %c0_23 = arith.constant 0 : index
      %c0_24 = arith.constant 0 : index
      %46 = vector.load %arg5[%c0_23, %c0_24] : memref<1x16xf32, #tpu.memory_space<vmem>>, vector<1x16xf32>
      tpu.vector_store %arg5[%c0_23, %c0_24], %45 {strides = array<i32>} : memref<1x16xf32, #tpu.memory_space<vmem>>, vector<1x16xf32>,
    } else {
    }
    %c0 = arith.constant 0 : index
    %c0_1 = arith.constant 0 : index
    %3 = vector.load %arg1[%c0, %c0_1] : memref<32x16xf32, #tpu.memory_space<vmem>>, vector<32x16xf32>
    %c0_2 = arith.constant 0 : index
    %c0_3 = arith.constant 0 : index
    %4 = vector.load %arg2[%c0_2, %c0_3] : memref<1x16xi32, #tpu.memory_space<vmem>>, vector<1x16xi32>
    %5 = tpu.iota {dimensions = array<i32: 1>} : vector<1x16xi32>
    %c16_i32 = arith.constant 16 : i32
    %6 = arith.muli %arg0, %c16_i32 : i32
    %7 = vector.broadcast %6 : i32 to vector<1x16xi32>
    %8 = arith.addi %5, %7 : vector<1x16xi32>
    %c16_i32_4 = arith.constant 16 : i32
    %9 = vector.broadcast %c16_i32_4 : i32 to vector<1x16xi32>
    %10 = arith.cmpi slt, %8, %9 : vector<1x16xi32>
    %c-1_i32 = arith.constant -1 : i32
    %11 = vector.broadcast %c-1_i32 : i32 to vector<1x16xi32>
    %12 = arith.cmpi ne, %4, %11 : vector<1x16xi32>
    %13 = arith.andi %10, %12 : vector<1x16xi1>
    %cst = arith.constant dense<0xFF800000> : vector<16xf32>
    %14 = vector.multi_reduction <maximumf>, %3, %cst [0] : vector<32x16xf32> to vector<16xf32>
    %15 = vector.shape_cast %14 : vector<16xf32> to vector<1x16xf32>
    %16 = vector.broadcast %15 : vector<1x16xf32> to vector<32x16xf32>
    %17 = arith.subf %3, %16 : vector<32x16xf32>
    %18 = tpu.iota {dimensions = array<i32: 0>} : vector<32x16xi32>
    %19 = vector.broadcast %4 : vector<1x16xi32> to vector<32x16xi32>
    %20 = arith.cmpi eq, %18, %19 : vector<32x16xi32>
    %cst_5 = arith.constant 0.000000e+00 : f32
    %21 = vector.broadcast %cst_5 : f32 to vector<32x16xf32>
    %22 = arith.select %20, %17, %21 : vector<32x16xi1>, vector<32x16xf32>
    %cst_6 = arith.constant dense<0.000000e+00> : vector<16xf32>
    %23 = vector.multi_reduction <add>, %22, %cst_6 [0] : vector<32x16xf32> to vector<16xf32>
    %24 = vector.shape_cast %23 : vector<16xf32> to vector<1x16xf32>
    %25 = math.exp %17 : vector<32x16xf32>
    %cst_7 = arith.constant dense<0.000000e+00> : vector<16xf32>
    %26 = vector.multi_reduction <add>, %25, %cst_7 [0] : vector<32x16xf32> to vector<16xf32>
    %27 = vector.shape_cast %26 : vector<16xf32> to vector<1x16xf32>
    %28 = math.log %27 : vector<1x16xf32>
    %29 = arith.subf %28, %24 : vector<1x16xf32>
    %c0_8 = arith.constant 0 : index
    %c0_9 = arith.constant 0 : index
    %30 = vector.load %arg4[%c0_8, %c0_9] : memref<1x16xf32, #tpu.memory_space<vmem>>, vector<1x16xf32>
    %cst_10 = arith.constant 0.000000e+00 : f32
    %31 = vector.broadcast %cst_10 : f32 to vector<1x16xf32>
    %32 = arith.select %13, %29, %31 : vector<1x16xi1>, vector<1x16xf32>
    %33 = arith.addf %30, %32 : vector<1x16xf32>
    %c0_11 = arith.constant 0 : index
    %c0_12 = arith.constant 0 : index
    %34 = vector.load %arg4[%c0_11, %c0_12] : memref<1x16xf32, #tpu.memory_space<vmem>>, vector<1x16xf32>
    tpu.vector_store %arg4[%c0_11, %c0_12], %33 {strides = array<i32>} : memref<1x16xf32, #tpu.memory_space<vmem>>, vector<1x16xf32>,
    %c0_13 = arith.constant 0 : index
    %c0_14 = arith.constant 0 : index
    %35 = vector.load %arg5[%c0_13, %c0_14] : memref<1x16xf32, #tpu.memory_space<vmem>>, vector<1x16xf32>
    %36 = arith.extui %13 : vector<1x16xi1> to vector<1x16xi32>
    %37 = arith.sitofp %36 : vector<1x16xi32> to vector<1x16xf32>
    %38 = arith.addf %35, %37 : vector<1x16xf32>
    %c0_15 = arith.constant 0 : index
    %c0_16 = arith.constant 0 : index
    %39 = vector.load %arg5[%c0_15, %c0_16] : memref<1x16xf32, #tpu.memory_space<vmem>>, vector<1x16xf32>
    tpu.vector_store %arg5[%c0_15, %c0_16], %38 {strides = array<i32>} : memref<1x16xf32, #tpu.memory_space<vmem>>, vector<1x16xf32>,
    %c0_i32_17 = arith.constant 0 : i32
    %40 = arith.cmpi eq, %arg0, %c0_i32_17 : i32
    %41 = arith.extui %40 : i1 to i32
    %c0_i32_18 = arith.constant 0 : i32
    %42 = arith.cmpi ne, %41, %c0_i32_18 : i32
    scf.if %42 {
      %c0_19 = arith.constant 0 : index
      %c0_20 = arith.constant 0 : index
      %43 = vector.load %arg4[%c0_19, %c0_20] : memref<1x16xf32, #tpu.memory_space<vmem>>, vector<1x16xf32>
      %cst_21 = arith.constant dense<0.000000e+00> : vector<1xf32>
      %44 = vector.multi_reduction <add>, %43, %cst_21 [1] : vector<1x16xf32> to vector<1xf32>
      %45 = vector.shape_cast %44 : vector<1xf32> to vector<1x1xf32>
      %c0_22 = arith.constant 0 : index
      %c0_23 = arith.constant 0 : index
      %46 = vector.load %arg5[%c0_22, %c0_23] : memref<1x16xf32, #tpu.memory_space<vmem>>, vector<1x16xf32>
      %cst_24 = arith.constant dense<0.000000e+00> : vector<1xf32>
      %47 = vector.multi_reduction <add>, %46, %cst_24 [1] : vector<1x16xf32> to vector<1xf32>
      %48 = vector.shape_cast %47 : vector<1xf32> to vector<1x1xf32>
      %49 = arith.divf %45, %48 : vector<1x1xf32>
      %c0_25 = arith.constant 0 : index
      %c0_26 = arith.constant 0 : index
      %50 = vector.load %arg3[%c0_25, %c0_26] : memref<1x1xf32, #tpu.memory_space<vmem>>, vector<1x1xf32>
      tpu.vector_store %arg3[%c0_25, %c0_26], %49 {strides = array<i32>} : memref<1x1xf32, #tpu.memory_space<vmem>>, vector<1x1xf32>,
    } else {
    }
    return
  }
  func.func @transform_0(%arg0: i32) -> (i32, i32) {
    %c0_i32 = arith.constant 0 : i32
    %c0_i32_0 = arith.constant 0 : i32
    return %c0_i32, %arg0 : i32, i32
  }
  func.func @transform_1(%arg0: i32) -> (i32, i32) {
    %c0_i32 = arith.constant 0 : i32
    %c0_i32_0 = arith.constant 0 : i32
    return %c0_i32, %arg0 : i32, i32
  }
  func.func @transform_2(%arg0: i32) -> (i32, i32) {
    %c0_i32 = arith.constant 0 : i32
    %c0_i32_0 = arith.constant 0 : i32
    %c0_i32_1 = arith.constant 0 : i32
    return %c0_i32, %c0_i32_0 : i32, i32
  }
}

</mosaic_0001>

<llo_original>
// kernel: tpu_custom_call.1
$region0: #{tpu_custom_call.1}
  #allocation0 [shape = 'u32[]', space=smem, size = 0x4, offset = 0x4, fixed_abs, tag = 'smem constant byte address 0x4 - core index']
  #allocation1 [shape = 'u32[144,128]{1,0:T(1,128)}', space=vmem, size = 0x12000, scoped, tag = 'internal scratch']
  #allocation2 [shape = 'f32[1,16]{1,0:T(1,128)}', space=vmem, size = 0x200, scoped, tag = 'scratch operand']
  #allocation3 [shape = 'f32[1,16]{1,0:T(1,128)}', space=vmem, size = 0x200, scoped, tag = 'scratch operand']
  %s0 = inlined_call_operand.vmem [shape: f32[32,16], index: 0, kind: input, shape index: {}]
  %s1 = inlined_call_operand.vmem [shape: s32[1,16], index: 1, kind: input, shape index: {}]
  %s2 = inlined_call_operand.hbm [shape: f32[1,1], index: 2, kind: output, shape index: {}]
  %s3 = sld [smem:[#allocation0]]
  $region26: #{tpu_custom_call.1} parent=0
    _
  %s5 = ssub.s32 1, %s3
  %s6 = scalar_select 0, %s5, %s3
  $region1: #{tpu_custom_call.1} parent=0
    #allocation4 [shape = 'u8[512]{0}', space=vmem, size = 0x400, scoped, tag = 'output window, operand 0, single buffered']
    #allocation5 [shape = 's32[1]{0}', space=sflag, size = 0x4, scoped, tag = 'scoped memory for tpu_custom_call.1']
    %7 = vsyncpa [#allocation5], 0
    // Predicated region
    $region2: #{tpu_custom_call.1} parent=1 // pred_check
      _
    $region3: #{tpu_custom_call.1} parent=1 // pred_check_branch
      %9 = sbr.rel (0) target = $region5
    $region4: #{tpu_custom_call.1} parent=1 // pred_region
      _
    $region5: #{tpu_custom_call.1} parent=1 // pred_fallthru
      _
    // Predicated region
    $region6: #{tpu_custom_call.1} parent=1 // pred_check
      _
    $region7: #{tpu_custom_call.1} parent=1 // pred_check_branch
      %11 = sbr.rel (0) target = $region9
    $region8: #{tpu_custom_call.1} parent=1 // pred_region
      _
    $region9: #{tpu_custom_call.1} parent=1 // pred_fallthru
      _
    %p12 = scmp.eq.s32.totalorder 0, 0
    // Predicated region
    $region10: #{tpu_custom_call.1} parent=1 // pred_check
      %p13 = pneg %p12
    $region11: #{tpu_custom_call.1} parent=1 // pred_check_branch
      %15 = sbr.rel (%p13) target = $region13
    $region12: #{tpu_custom_call.1} parent=1 // pred_region
      %vm16 = vcmask 122880
      %17 = vst.msk [vmem:[#allocation2] sm:$0x1] %vm16, 0.0
      %18 = vst.msk [vmem:[#allocation3] sm:$0x1] %vm16, 0.0
    $region13: #{tpu_custom_call.1} parent=1 // pred_fallthru
      _
    %v19 = vld [vmem:[%s0] sm:$0xff]
    %v20 = vld [vmem:[%s0 + $0x8] sm:$0xff]
    %v21 = vld [vmem:[%s0 + $0x10] sm:$0xff]
    %v22 = vld [vmem:[%s0 + $0x18] sm:$0xff]
    %v23 = vld [vmem:[%s1] sm:$0x1]
    %v24 = vlaneseq
    %v25 = vand.u32 %v24, 127
    %s26 = smul.u32 0, 16
    %v27 = vstv %s26
    %v28 = vadd.s32 %v25, %v27
    %vm29 = vcmp.lt.s32.totalorder %v28, 16
    %vm30 = vcmp.ne.s32.totalorder %v23, 4294967295
    %vm31 = vmand %vm29, %vm30
    %vm32 = vcmask 130048
    %v33 = vsel %vm32, %v19, -inf
    %v34 = vsel %vm32, %v20, -inf
    %v35 = vsel %vm32, %v21, -inf
    %v36 = vsel %vm32, %v22, -inf
    %v37 = vmax.f32 %v33, %v34
    %v38 = vmax.f32 %v35, %v36
    %v39 = vmax.f32 %v37, %v38
    %v40 = vrot.slane %v39, 4
    %v41 = vmax.f32 %v39, %v40
    %v42 = vrot.slane %v41, 2
    %v43 = vmax.f32 %v41, %v42
    %v44 = vrot.slane %v43, 1
    %v45 = vmax.f32 %v43, %v44
    %v46 = vsub.f32 %v19, %v45
    %v47 = vsub.f32 %v20, %v45
    %v48 = vsub.f32 %v21, %v45
    %v49 = vsub.f32 %v22, %v45
    %v50 = vlaneseq
    %v51 = vshrl.u32 %v50, 7
    %v52 = vadd.s32 %v51, 8
    %v53 = vadd.s32 %v51, 16
    %v54 = vadd.s32 %v51, 24
    %v55 = vlaneseq
    %v56 = vshrl.u32 %v55, 7
    %v57 = vsub.s32 0, %v56
    %v58 = vrot.slane %v23, %v57
    %vm59 = vcmp.eq.s32.totalorder %v51, %v58
    %vm60 = vcmp.eq.s32.totalorder %v52, %v58
    %vm61 = vcmp.eq.s32.totalorder %v53, %v58
    %vm62 = vcmp.eq.s32.totalorder %v54, %v58
    %v63 = vsel %vm59, %v46, 0.0
    %v64 = vsel %vm60, %v47, 0.0
    %v65 = vsel %vm61, %v48, 0.0
    %v66 = vsel %vm62, %v49, 0.0
    %v67 = vsel %vm32, %v63, 0.0
    %v68 = vsel %vm32, %v64, 0.0
    %v69 = vadd.f32 %v67, %v68
    %v70 = vsel %vm32, %v65, 0.0
    %v71 = vadd.f32 %v69, %v70
    %v72 = vsel %vm32, %v66, 0.0
    %v73 = vadd.f32 %v71, %v72
    %v74 = vrot.slane %v73, 4
    %v75 = vadd.f32 %v73, %v74
    %v76 = vrot.slane %v75, 2
    %v77 = vadd.f32 %v75, %v76
    %v78 = vrot.slane %v77, 1
    %v79 = vadd.f32 %v77, %v78
    %v80 = vmul.f32 %v46, 1.442695
    %v81 = vpow.pop %v80
    %v82 = vmul.f32 %v47, 1.442695
    %v83 = vpow.pop %v82
    %v84 = vmul.f32 %v48, 1.442695
    %v85 = vpow.pop %v84
    %v86 = vmul.f32 %v49, 1.442695
    %v87 = vpow.pop %v86
    %v88 = vsel %vm32, %v81, 0.0
    %v89 = vsel %vm32, %v83, 0.0
    %v90 = vadd.f32 %v88, %v89
    %v91 = vsel %vm32, %v85, 0.0
    %v92 = vadd.f32 %v90, %v91
    %v93 = vsel %vm32, %v87, 0.0
    %v94 = vadd.f32 %v92, %v93
    %v95 = vrot.slane %v94, 4
    %v96 = vadd.f32 %v94, %v95
    %v97 = vrot.slane %v96, 2
    %v98 = vadd.f32 %v96, %v97
    %v99 = vrot.slane %v98, 1
    %v100 = vadd.f32 %v98, %v99
    %v101 = vlog2.pop %v100
    %v102 = vmul.f32 %v101, 0.6931472
    %v103 = vsub.f32 %v102, %v79
    %v104 = vld [vmem:[#allocation2] sm:$0x1]
    %v105 = vsel %vm31, %v103, 0.0
    %v106 = vadd.f32 %v104, %v105
    %vm107 = vcmask 122880
    %108 = vst.msk [vmem:[#allocation2] sm:$0x1] %vm107, %v106
    %v109 = vld [vmem:[#allocation3] sm:$0x1]
    %v110 = vsel %vm31, 1, 0
    %v111 = vcvt.s32.f32 %v110
    %v112 = vadd.f32 %v109, %v111
    %113 = vst.msk [vmem:[#allocation3] sm:$0x1] %vm107, %v112
    // Predicated region
    $region14: #{tpu_custom_call.1} parent=1 // pred_check
      %p114 = pneg %p12
    $region15: #{tpu_custom_call.1} parent=1 // pred_check_branch
      %116 = sbr.rel (%p114) target = $region17
    $region16: #{tpu_custom_call.1} parent=1 // pred_region
      %v117 = vld [vmem:[#allocation2] sm:$0x1]
      %v118 = vsel %vm107, %v117, 0.0
      %119 = vadd.xlane.f32.xlu0 %v118
      %v120 = vpop.xlane.xlu0 %119
      %v121 = vld [vmem:[#allocation3] sm:$0x1]
      %v122 = vsel %vm107, %v121, 0.0
      %123 = vadd.xlane.f32.xlu0 %v122
      %v124 = vpop.xlane.xlu0 %123
      %v125 = vrcp.pop %v124
      %v126 = vmul.f32 %v120, %v125
      %vm127 = vcmask 0
      %128 = vst.msk [vmem:[#allocation4] sm:$0x1] %vm127, %v126
    $region17: #{tpu_custom_call.1} parent=1 // pred_fallthru
      _
    // Predicated region
    $region18: #{tpu_custom_call.1} parent=1 // pred_check
      _
    $region19: #{tpu_custom_call.1} parent=1 // pred_check_branch
      %130 = sbr.rel (0) target = $region21
    $region20: #{tpu_custom_call.1} parent=1 // pred_region
      %s132 = ssub.s32 16, 16
      %133 = vsyncadd [#allocation5], %s132
      %s135 = sshll.u32 [#allocation4], 4
      %s136 = int_to_ptr.vmem [resolvable:$true] %s135
      %138 = dma.vmem_to_hbm [thread:$0]  %s136, 16, %s2, [#allocation5]
    $region21: #{tpu_custom_call.1} parent=1 // pred_fallthru
      _
    // Predicated region
    $region22: #{tpu_custom_call.1} parent=1 // pred_check
      _
    $region23: #{tpu_custom_call.1} parent=1 // pred_check_branch
      %140 = sbr.rel (0) target = $region25
    $region24: #{tpu_custom_call.1} parent=1 // pred_region
      %141 = dma.done [#allocation5], 16
    $region25: #{tpu_custom_call.1} parent=1 // pred_fallthru
      _
    %142 = vsyncpa [#allocation5], 1

</llo_original>
